<compile_context>
chip_gen: v7x
topology: tpu7x:2x2x1
jax: 0.10.0
libtpu: 0.0.40
codegen_flags: <defaults>
</compile_context>

<pallas_src>
import jax
import jax.numpy as jnp
from jax.experimental import pallas as pl
from jax.experimental.pallas import tpu as pltpu


def mlp_kernel(x_ref, w1_ref, b1_ref, w2_ref, b2_ref, o_ref):
    # Hidden layer: matmul on the MXU (f32 accumulation), bias + leaky_relu on VPU.
    h = jnp.dot(x_ref[...], w1_ref[...], preferred_element_type=jnp.float32)
    h = h + b1_ref[...]                       # broadcast [1, H] over [TB, H]
    h = jnp.maximum(h, 0.01 * h)              # leaky_relu (negative_slope=0.01)
    # Output layer.  Cast h to the weight dtype so the optional bf16 path uses
    # the native bf16 MXU; with f32 weights the cast is a no-op.
    y = jnp.dot(h.astype(w2_ref.dtype), w2_ref[...],
                preferred_element_type=jnp.float32)
    y = y + b2_ref[...]                       # broadcast [1, 2] over [TB, 2]
    o_ref[...] = y.astype(o_ref.dtype)


def mlp_handle_forward(x, w1, b1, w2, b2, *, block_b=1024, compute_dtype=None):
    """x: [B, input_dim] -> [B, 2] float32.

    block_b:       rows of x per grid step (batch tile).  Large tiles amortize
                   the per-step pipeline overhead; clamped to B and rounded to a
                   multiple of 8 (sublane constraint) when tiling.
    compute_dtype: e.g. jnp.bfloat16 to halve x/weight HBM traffic; f32 accum
                   and f32 bias/activation math are kept either way.
    """
    B, in_dim = x.shape
    hid = w1.shape[1]
    out_dim = w2.shape[1]

    if compute_dtype is not None:
        x = x.astype(compute_dtype)
        w1 = w1.astype(compute_dtype)
        w2 = w2.astype(compute_dtype)

    # Biases as 2-D row vectors (clean VMEM layout, broadcast over the tile).
    b1_2d = b1.reshape(1, hid).astype(jnp.float32)
    b2_2d = b2.reshape(1, out_dim).astype(jnp.float32)

    # Batch tile: second-to-last block dim must be a multiple of 8 or the full
    # array extent.
    TB = min(block_b, B)
    if TB != B:
        TB = max(8, (TB // 8) * 8)
    grid = (pl.cdiv(B, TB),)

    # Weights / biases: same block index every grid step -> resident in VMEM.
    def resident(a):
        return pl.BlockSpec(a.shape, lambda i: (0,) * a.ndim)

    return pl.pallas_call(
        mlp_kernel,
        out_shape=jax.ShapeDtypeStruct((B, out_dim), jnp.float32),
        grid_spec=pltpu.PrefetchScalarGridSpec(
            num_scalar_prefetch=0,
            grid=grid,
            in_specs=[
                pl.BlockSpec((TB, in_dim), lambda i: (i, 0)),   # x: tiled over batch
                resident(w1),
                resident(b1_2d),
                resident(w2),
                resident(b2_2d),
            ],
            out_specs=pl.BlockSpec((TB, out_dim), lambda i: (i, 0)),
        ),
        compiler_params=pltpu.CompilerParams(
            # Batch axis is embarrassingly parallel -> shard across v7x's 2 TCs;
            # harmless on single-TC v5e/v6e.
            dimension_semantics=("parallel",),
        ),
    )(x, w1, b1_2d, w2, b2_2d)


def _reference(x, w1, b1, w2, b2):
    h = x @ w1 + b1
    h = jnp.where(h > 0, h, 0.01 * h)
    return h @ w2 + b2


if __name__ == "__main__":
    # Config / params analogous to the PyTorch module.
    user_dim, item_dim, hidden_dim = 16, 16, 32
    input_dim = user_dim + item_dim

    key = jax.random.PRNGKey(0)
    kx, kw1, kb1, kw2, kb2, kx2 = jax.random.split(key, 6)

    # torch.randn-style parameter initialization, built deterministically here.
    w1 = jax.random.normal(kw1, (input_dim, hidden_dim), dtype=jnp.float32)
    b1 = jax.random.normal(kb1, (hidden_dim,), dtype=jnp.float32)
    w2 = jax.random.normal(kw2, (hidden_dim, 2), dtype=jnp.float32)
    b2 = jax.random.normal(kb2, (2,), dtype=jnp.float32)

    # 1) Small batch (single grid step) — matches the PyTorch module's usage.
    batch = 8
    x = jax.random.normal(kx, (batch, input_dim), dtype=jnp.float32)
    out = mlp_handle_forward(x, w1, b1, w2, b2)
    jax.block_until_ready(out)
    y_ref = _reference(x, w1, b1, w2, b2)
    assert out.shape == (batch, 2)
    assert jnp.allclose(out, y_ref, atol=1e-4, rtol=1e-4)

    # 2) Modest batch exercising the tiled / pipelined grid path (TB < B,
    #    including a partial last tile).
    big_batch = 200
    x_big = jax.random.normal(kx2, (big_batch, input_dim), dtype=jnp.float32)
    out_big = mlp_handle_forward(x_big, w1, b1, w2, b2, block_b=64)
    jax.block_until_ready(out_big)
    y_big_ref = _reference(x_big, w1, b1, w2, b2)
    assert out_big.shape == (big_batch, 2)
    assert jnp.allclose(out_big, y_big_ref, atol=1e-4, rtol=1e-4)

    print("KERNEL_OK")
</pallas_src>

<mosaic_0001>
module attributes {stable_mosaic.version = 11 : i64} {
  func.func @mlp_kernel(%arg0: i32, %arg1: memref<8x32xf32, #tpu.memory_space<vmem>>, %arg2: memref<32x32xf32, #tpu.memory_space<vmem>>, %arg3: memref<1x32xf32, #tpu.memory_space<vmem>>, %arg4: memref<32x2xf32, #tpu.memory_space<vmem>>, %arg5: memref<1x2xf32, #tpu.memory_space<vmem>>, %arg6: memref<8x2xf32, #tpu.memory_space<vmem>>) attributes {dimension_semantics = [#tpu.dimension_semantics<parallel>], iteration_bounds = array<i64: 1>, scalar_prefetch = 0 : i64, scratch_operands = 0 : i64, tpu.core_type = #tpu.core_type<tc>, window_params = [{transform_indices = @transform_0, window_bounds = array<i64: 8, 32>}, {pipeline_mode = #tpu.pipeline_mode<synchronous>, transform_indices = @transform_1, window_bounds = array<i64: 32, 32>}, {pipeline_mode = #tpu.pipeline_mode<synchronous>, transform_indices = @transform_2, window_bounds = array<i64: 1, 32>}, {pipeline_mode = #tpu.pipeline_mode<synchronous>, transform_indices = @transform_3, window_bounds = array<i64: 32, 2>}, {pipeline_mode = #tpu.pipeline_mode<synchronous>, transform_indices = @transform_4, window_bounds = array<i64: 1, 2>}, {transform_indices = @transform_5, window_bounds = array<i64: 8, 2>}]} {
    %c0 = arith.constant 0 : index
    %c0_0 = arith.constant 0 : index
    %0 = vector.load %arg1[%c0, %c0_0] : memref<8x32xf32, #tpu.memory_space<vmem>>, vector<8x32xf32>
    %c0_1 = arith.constant 0 : index
    %c0_2 = arith.constant 0 : index
    %1 = vector.load %arg2[%c0_1, %c0_2] : memref<32x32xf32, #tpu.memory_space<vmem>>, vector<32x32xf32>
    %cst = arith.constant dense<0.000000e+00> : vector<8x32xf32>
    %2 = tpu.matmul %0, %1, %cst {dimension_numbers = #tpu.dot_dimension_numbers<[1], [0], [0], [1], [0, 0, 1, 1], [], []>} : vector<8x32xf32>, vector<32x32xf32>, vector<8x32xf32> -> vector<8x32xf32>
    %c0_3 = arith.constant 0 : index
    %c0_4 = arith.constant 0 : index
    %3 = vector.load %arg3[%c0_3, %c0_4] : memref<1x32xf32, #tpu.memory_space<vmem>>, vector<1x32xf32>
    %4 = vector.broadcast %3 : vector<1x32xf32> to vector<8x32xf32>
    %5 = arith.addf %2, %4 : vector<8x32xf32>
    %cst_5 = arith.constant 0.00999999977 : f32
    %6 = vector.broadcast %cst_5 : f32 to vector<8x32xf32>
    %7 = arith.mulf %6, %5 : vector<8x32xf32>
    %8 = arith.maximumf %5, %7 : vector<8x32xf32>
    %c0_6 = arith.constant 0 : index
    %c0_7 = arith.constant 0 : index
    %9 = vector.load %arg4[%c0_6, %c0_7] : memref<32x2xf32, #tpu.memory_space<vmem>>, vector<32x2xf32>
    %cst_8 = arith.constant dense<0.000000e+00> : vector<8x2xf32>
    %10 = tpu.matmul %8, %9, %cst_8 {dimension_numbers = #tpu.dot_dimension_numbers<[1], [0], [0], [1], [0, 0, 1, 1], [], []>} : vector<8x32xf32>, vector<32x2xf32>, vector<8x2xf32> -> vector<8x2xf32>
    %c0_9 = arith.constant 0 : index
    %c0_10 = arith.constant 0 : index
    %11 = vector.load %arg5[%c0_9, %c0_10] : memref<1x2xf32, #tpu.memory_space<vmem>>, vector<1x2xf32>
    %12 = vector.broadcast %11 : vector<1x2xf32> to vector<8x2xf32>
    %13 = arith.addf %10, %12 : vector<8x2xf32>
    %c0_11 = arith.constant 0 : index
    %c0_12 = arith.constant 0 : index
    %14 = vector.load %arg6[%c0_11, %c0_12] : memref<8x2xf32, #tpu.memory_space<vmem>>, vector<8x2xf32>
    tpu.vector_store %arg6[%c0_11, %c0_12], %13 {strides = array<i32>} : memref<8x2xf32, #tpu.memory_space<vmem>>, vector<8x2xf32>,
    return
  }
  func.func @transform_0(%arg0: i32) -> (i32, i32) {
    %c0_i32 = arith.constant 0 : i32
    %c0_i32_0 = arith.constant 0 : i32
    return %arg0, %c0_i32 : i32, i32
  }
  func.func @transform_1(%arg0: i32) -> (i32, i32) {
    %c0_i32 = arith.constant 0 : i32
    %c0_i32_0 = arith.constant 0 : i32
    %c0_i32_1 = arith.constant 0 : i32
    return %c0_i32, %c0_i32_0 : i32, i32
  }
  func.func @transform_2(%arg0: i32) -> (i32, i32) {
    %c0_i32 = arith.constant 0 : i32
    %c0_i32_0 = arith.constant 0 : i32
    %c0_i32_1 = arith.constant 0 : i32
    return %c0_i32, %c0_i32_0 : i32, i32
  }
  func.func @transform_3(%arg0: i32) -> (i32, i32) {
    %c0_i32 = arith.constant 0 : i32
    %c0_i32_0 = arith.constant 0 : i32
    %c0_i32_1 = arith.constant 0 : i32
    return %c0_i32, %c0_i32_0 : i32, i32
  }
  func.func @transform_4(%arg0: i32) -> (i32, i32) {
    %c0_i32 = arith.constant 0 : i32
    %c0_i32_0 = arith.constant 0 : i32
    %c0_i32_1 = arith.constant 0 : i32
    return %c0_i32, %c0_i32_0 : i32, i32
  }
  func.func @transform_5(%arg0: i32) -> (i32, i32) {
    %c0_i32 = arith.constant 0 : i32
    %c0_i32_0 = arith.constant 0 : i32
    return %arg0, %c0_i32 : i32, i32
  }
}

</mosaic_0001>

<llo_original>
// kernel: tpu_custom_call.1
$region0: #{tpu_custom_call.1}
  #allocation0 [shape = 'u32[]', space=smem, size = 0x4, offset = 0x4, fixed_abs, tag = 'smem constant byte address 0x4 - core index']
  #allocation1 [shape = 'u32[144,128]{1,0:T(1,128)}', space=vmem, size = 0x12000, scoped, tag = 'internal scratch']
  %s0 = inlined_call_operand.hbm [shape: f32[8,32], index: 0, kind: input, shape index: {}]
  %s1 = inlined_call_operand.vmem [shape: f32[32,32], index: 1, kind: input, shape index: {}]
  %s2 = inlined_call_operand.vmem [shape: f32[1,32], index: 2, kind: input, shape index: {}]
  %s3 = inlined_call_operand.vmem [shape: f32[32,2], index: 3, kind: input, shape index: {}]
  %s4 = inlined_call_operand.vmem [shape: f32[1,2], index: 4, kind: input, shape index: {}]
  %s5 = inlined_call_operand.vmem [shape: f32[8,2], index: 5, kind: output, shape index: {}]
  %s6 = sld [smem:[#allocation0]]
  $region34: #{tpu_custom_call.1} parent=0
    _
  %s8 = ssub.s32 1, %s6
  %s9 = scalar_select 0, %s8, %s6
  $region1: #{tpu_custom_call.1} parent=0
    #allocation2 [shape = 'u8[4096]{0}', space=vmem, size = 0x1000, scoped, tag = 'input window, operand 0, single buffered']
    #allocation3 [shape = 's32[1]{0}', space=sflag, size = 0x4, scoped, tag = 'scoped memory for tpu_custom_call.1']
    %10 = vsyncpa [#allocation3], 0
    // Predicated region
    $region2: #{tpu_custom_call.1} parent=1 // pred_check
      _
    $region3: #{tpu_custom_call.1} parent=1 // pred_check_branch
      %12 = sbr.rel (0) target = $region5
    $region4: #{tpu_custom_call.1} parent=1 // pred_region
      %s14 = ssub.s32 128, 128
      %15 = vsyncadd [#allocation3], %s14
      %s17 = sshll.u32 [#allocation2], 4
      %s18 = int_to_ptr.vmem [resolvable:$true] %s17
      %20 = dma.hbm_to_vmem [thread:$0]  %s0, 128, %s18, [#allocation3]
    $region5: #{tpu_custom_call.1} parent=1 // pred_fallthru
      _
    // Predicated region
    $region6: #{tpu_custom_call.1} parent=1 // pred_check
      _
    $region7: #{tpu_custom_call.1} parent=1 // pred_check_branch
      %22 = sbr.rel (0) target = $region9
    $region8: #{tpu_custom_call.1} parent=1 // pred_region
      _
    $region9: #{tpu_custom_call.1} parent=1 // pred_fallthru
      _
    // Predicated region
    $region10: #{tpu_custom_call.1} parent=1 // pred_check
      _
    $region11: #{tpu_custom_call.1} parent=1 // pred_check_branch
      %24 = sbr.rel (0) target = $region13
    $region12: #{tpu_custom_call.1} parent=1 // pred_region
      _
    $region13: #{tpu_custom_call.1} parent=1 // pred_fallthru
      _
    // Predicated region
    $region14: #{tpu_custom_call.1} parent=1 // pred_check
      _
    $region15: #{tpu_custom_call.1} parent=1 // pred_check_branch
      %26 = sbr.rel (0) target = $region17
    $region16: #{tpu_custom_call.1} parent=1 // pred_region
      _
    $region17: #{tpu_custom_call.1} parent=1 // pred_fallthru
      _
    // Predicated region
    $region18: #{tpu_custom_call.1} parent=1 // pred_check
      _
    $region19: #{tpu_custom_call.1} parent=1 // pred_check_branch
      %28 = sbr.rel (0) target = $region21
    $region20: #{tpu_custom_call.1} parent=1 // pred_region
      _
    $region21: #{tpu_custom_call.1} parent=1 // pred_fallthru
      _
    // Predicated region
    $region22: #{tpu_custom_call.1} parent=1 // pred_check
      _
    $region23: #{tpu_custom_call.1} parent=1 // pred_check_branch
      %30 = sbr.rel (0) target = $region25
    $region24: #{tpu_custom_call.1} parent=1 // pred_region
      %31 = dma.done [#allocation3], 128
    $region25: #{tpu_custom_call.1} parent=1 // pred_fallthru
      _
    %v32 = vld [vmem:[#allocation2] sm:$0xff]
    %v33 = vld [vmem:[%s1] sm:$0xff]
    %v34 = vld [vmem:[%s1 + $0x8] sm:$0xff]
    %v35 = vld [vmem:[%s1 + $0x10] sm:$0xff]
    %v36 = vld [vmem:[%s1 + $0x18] sm:$0xff]
    %v37 = vld [vmem:[%s2] sm:$0x1]
    %v39 = vlaneseq
    %v40 = vshrl.u32 %v39, 7
    %v41 = vsub.s32 0, %v40
    %v42 = vrot.slane %v37, %v41
    %vm44 = vcmask 261120
    %v46 = vsel %vm44, %v32, 0
    %48 = vmatprep.subr.mxu0 0.0
    %49 = vmatpush1.msra.mxu0 %v33
    %50 = vmatprep.subr.mxu0 0.0
    %51 = vmatpush1.msra.mxu0 %v34
    %52 = vmatprep.subr.mxu0 0.0
    %53 = vmatpush1.msra.mxu0 %v35
    %54 = vmatprep.subr.mxu0 0.0
    %55 = vmatpush1.msra.mxu0 %v36
    %56 = vmatprep.subr.mxu0 0.0
    %57 = vmatpush1.msra.mxu0 0.0
    %58 = vmatprep.subr.mxu0 0.0
    %59 = vmatpush1.msra.mxu0 0.0
    %60 = vmatprep.subr.mxu0 0.0
    %61 = vmatpush1.msra.mxu0 0.0
    %62 = vmatprep.subr.mxu0 0.0
    %63 = vmatpush1.msra.mxu0 0.0
    %64 = vmatprep.subr.mxu0 0.0
    %65 = vmatpush1.msra.mxu0 0.0
    %66 = vmatprep.subr.mxu0 0.0
    %67 = vmatpush1.msra.mxu0 0.0
    %68 = vmatprep.subr.mxu0 0.0
    %69 = vmatpush1.msra.mxu0 0.0
    %70 = vmatprep.subr.mxu0 0.0
    %71 = vmatpush1.msra.mxu0 0.0
    %72 = vmatprep.subr.mxu0 0.0
    %73 = vmatpush1.msra.mxu0 0.0
    %74 = vmatprep.subr.mxu0 0.0
    %75 = vmatpush1.msra.mxu0 0.0
    %76 = vmatprep.subr.mxu0 0.0
    %77 = vmatpush1.msra.mxu0 0.0
    %78 = vmatprep.subr.mxu0 0.0
    %79 = vmatpush1.msra.mxu0 0.0
    %80 = vmatprep.subr.mxu0 0.0
    %81 = vmatpush1.msra.mxu0 0.0
    %82 = vmatprep.subr.mxu0 0.0
    %83 = vmatpush1.msra.mxu0 0.0
    %84 = vmatprep.subr.mxu0 0.0
    %85 = vmatpush1.msra.mxu0 0.0
    %86 = vmatprep.subr.mxu0 0.0
    %87 = vmatpush1.msra.mxu0 0.0
    %88 = vmatprep.subr.mxu0 0.0
    %89 = vmatpush1.msra.mxu0 0.0
    %90 = vmatprep.subr.mxu0 0.0
    %91 = vmatpush1.msra.mxu0 0.0
    %92 = vmatprep.subr.mxu0 0.0
    %93 = vmatpush1.msra.mxu0 0.0
    %94 = vmatprep.subr.mxu0 0.0
    %95 = vmatpush1.msra.mxu0 0.0
    %96 = vmatprep.subr.mxu0 0.0
    %97 = vmatpush1.msra.mxu0 0.0
    %98 = vmatprep.subr.mxu0 0.0
    %99 = vmatpush1.msra.mxu0 0.0
    %100 = vmatprep.subr.mxu0 0.0
    %101 = vmatpush1.msra.mxu0 0.0
    %102 = vmatprep.subr.mxu0 0.0
    %103 = vmatpush1.msra.mxu0 0.0
    %104 = vmatprep.subr.mxu0 0.0
    %105 = vmatpush1.msra.mxu0 0.0
    %106 = vmatprep.subr.mxu0 0.0
    %107 = vmatpush1.msra.mxu0 0.0
    %108 = vmatprep.subr.mxu0 0.0
    %109 = vmatpush1.msra.mxu0 0.0
    %110 = vmatprep.subr.mxu0 0.0
    %111 = vmatpush1.msra.mxu0 0.0
    %112 = vmatprep.mubr.f32.mxu0 0.0
    %113 = vmatmul.mubr.f32.gmra.mrb[0].mxu0 %v46
    %v114 = vpop.f32.mrb[0].mxu0
    %v115 = vadd.f32 %v42, %v114
    %v116 = vpop.f32.mrb[0].mxu0
    %117 = vdwg.mxu0
    %v118 = vmul.f32 %v115, 0.01
    %v119 = vmax.f32 %v115, %v118
    %v120 = vld [vmem:[%s3] sm:$0xff]
    %v121 = vld [vmem:[%s3 + $0x8] sm:$0xff]
    %v122 = vld [vmem:[%s3 + $0x10] sm:$0xff]
    %v123 = vld [vmem:[%s3 + $0x18] sm:$0xff]
    %v124 = vld [vmem:[%s4] sm:$0x1]
    %v126 = vlaneseq
    %v127 = vshrl.u32 %v126, 7
    %v128 = vsub.s32 0, %v127
    %v129 = vrot.slane %v124, %v128
    %v132 = vsel %vm44, %v119, 0
    %134 = vmatprep.subr.mxu0 0.0
    %135 = vmatpush1.msra.mxu0 %v120
    %136 = vmatprep.subr.mxu0 0.0
    %137 = vmatpush1.msra.mxu0 %v121
    %138 = vmatprep.subr.mxu0 0.0
    %139 = vmatpush1.msra.mxu0 %v122
    %140 = vmatprep.subr.mxu0 0.0
    %141 = vmatpush1.msra.mxu0 %v123
    %142 = vmatprep.subr.mxu0 0.0
    %143 = vmatpush1.msra.mxu0 0.0
    %144 = vmatprep.subr.mxu0 0.0
    %145 = vmatpush1.msra.mxu0 0.0
    %146 = vmatprep.subr.mxu0 0.0
    %147 = vmatpush1.msra.mxu0 0.0
    %148 = vmatprep.subr.mxu0 0.0
    %149 = vmatpush1.msra.mxu0 0.0
    %150 = vmatprep.subr.mxu0 0.0
    %151 = vmatpush1.msra.mxu0 0.0
    %152 = vmatprep.subr.mxu0 0.0
    %153 = vmatpush1.msra.mxu0 0.0
    %154 = vmatprep.subr.mxu0 0.0
    %155 = vmatpush1.msra.mxu0 0.0
    %156 = vmatprep.subr.mxu0 0.0
    %157 = vmatpush1.msra.mxu0 0.0
    %158 = vmatprep.subr.mxu0 0.0
    %159 = vmatpush1.msra.mxu0 0.0
    %160 = vmatprep.subr.mxu0 0.0
    %161 = vmatpush1.msra.mxu0 0.0
    %162 = vmatprep.subr.mxu0 0.0
    %163 = vmatpush1.msra.mxu0 0.0
    %164 = vmatprep.subr.mxu0 0.0
    %165 = vmatpush1.msra.mxu0 0.0
    %166 = vmatprep.subr.mxu0 0.0
    %167 = vmatpush1.msra.mxu0 0.0
    %168 = vmatprep.subr.mxu0 0.0
    %169 = vmatpush1.msra.mxu0 0.0
    %170 = vmatprep.subr.mxu0 0.0
    %171 = vmatpush1.msra.mxu0 0.0
    %172 = vmatprep.subr.mxu0 0.0
    %173 = vmatpush1.msra.mxu0 0.0
    %174 = vmatprep.subr.mxu0 0.0
    %175 = vmatpush1.msra.mxu0 0.0
    %176 = vmatprep.subr.mxu0 0.0
    %177 = vmatpush1.msra.mxu0 0.0
    %178 = vmatprep.subr.mxu0 0.0
    %179 = vmatpush1.msra.mxu0 0.0
    %180 = vmatprep.subr.mxu0 0.0
    %181 = vmatpush1.msra.mxu0 0.0
    %182 = vmatprep.subr.mxu0 0.0
    %183 = vmatpush1.msra.mxu0 0.0
    %184 = vmatprep.subr.mxu0 0.0
    %185 = vmatpush1.msra.mxu0 0.0
    %186 = vmatprep.subr.mxu0 0.0
    %187 = vmatpush1.msra.mxu0 0.0
    %188 = vmatprep.subr.mxu0 0.0
    %189 = vmatpush1.msra.mxu0 0.0
    %190 = vmatprep.subr.mxu0 0.0
    %191 = vmatpush1.msra.mxu0 0.0
    %192 = vmatprep.subr.mxu0 0.0
    %193 = vmatpush1.msra.mxu0 0.0
    %194 = vmatprep.subr.mxu0 0.0
    %195 = vmatpush1.msra.mxu0 0.0
    %196 = vmatprep.subr.mxu0 0.0
    %197 = vmatpush1.msra.mxu0 0.0
    %198 = vmatprep.mubr.f32.mxu0 0.0
    %199 = vmatmul.mubr.f32.gmra.mrb[0].mxu0 %v132
    %v200 = vpop.f32.mrb[0].mxu0
    %v201 = vadd.f32 %v129, %v200
    %v202 = vpop.f32.mrb[0].mxu0
    %203 = vdwg.mxu0
    %vm204 = vcmask 15360
    %205 = vst.msk [vmem:[%s5] sm:$0xff] %vm204, %v201
    // Predicated region
    $region26: #{tpu_custom_call.1} parent=1 // pred_check
      _
    $region27: #{tpu_custom_call.1} parent=1 // pred_check_branch
      %207 = sbr.rel (0) target = $region29
    $region28: #{tpu_custom_call.1} parent=1 // pred_region
      _
    $region29: #{tpu_custom_call.1} parent=1 // pred_fallthru
      _
    // Predicated region
    $region30: #{tpu_custom_call.1} parent=1 // pred_check
      _
    $region31: #{tpu_custom_call.1} parent=1 // pred_check_branch
      %209 = sbr.rel (0) target = $region33
    $region32: #{tpu_custom_call.1} parent=1 // pred_region
      _
    $region33: #{tpu_custom_call.1} parent=1 // pred_fallthru
      _
    %210 = vsyncpa [#allocation3], 1

</llo_original>
